<compile_context>
chip_gen: v7x
topology: tpu7x:2x2x1
jax: 0.10.0
libtpu: 0.0.40
codegen_flags: <defaults>
</compile_context>

<pallas_src>
import math

import jax
import jax.numpy as jnp
from jax import lax
from jax.experimental import pallas as pl
from jax.experimental.pallas import tpu as pltpu


def policy_discrete_kernel(x_ref, w1_ref, b1_ref, w2_ref, b2_ref, w3_ref, b3_ref, out_ref):
    """One batch tile.

    x_ref  : (tb, state_dim)   natural layout
    wN     : (out, in)         bN : (out, 1)
    out_ref: (action_dim, tb)  transposed (batch on the 128-lane axis)
    """
    # linear_1 + leaky_relu(0.01): contract state_dim of both operands so the
    # MXU consumes x untransposed and emits h^T = (hidden, tb) directly.
    h = lax.dot_general(
        w1_ref[...], x_ref[...],
        dimension_numbers=(((1,), (1,)), ((), ())),
        preferred_element_type=jnp.float32,
    ) + b1_ref[...]
    h = jnp.maximum(h, 0.01 * h)

    # linear_2 + leaky_relu(0.01)
    h = jnp.dot(w2_ref[...], h, preferred_element_type=jnp.float32) + b2_ref[...]
    h = jnp.maximum(h, 0.01 * h)

    # linear_3 + softmax over actions (axis 0 == sublane axis), numerically stable.
    logits = jnp.dot(w3_ref[...], h, preferred_element_type=jnp.float32) + b3_ref[...]
    m = jnp.max(logits, axis=0, keepdims=True)
    e = jnp.exp(logits - m)
    s = jnp.sum(e, axis=0, keepdims=True)
    out_ref[...] = (e * (1.0 / s)).astype(out_ref.dtype)  # exact divide: (1, tb) only


def policy_discrete_forward(x, params, *, block_b=8192, action_major=False):
    """x: (B, state_dim) f32. Returns (B, action_dim), or (action_dim, B) if action_major."""
    w1, b1 = params["w1"], params["b1"]
    w2, b2 = params["w2"], params["b2"]
    w3, b3 = params["w3"], params["b3"]

    B, state_dim = x.shape
    action_dim = w3.shape[0]

    # Lane-aligned batch tile: force a multiple of 128, cap at block_b, and do not
    # exceed round_up(B, 128) (no point in a tile bigger than the batch).
    tb_cap = max(128, (block_b // 128) * 128)
    tb = min(tb_cap, ((B + 127) // 128) * 128)
    grid = (pl.cdiv(B, tb),)   # ragged last block handled by Pallas (no jnp.pad)

    # Weights/biases: full blocks, constant index_map -> VMEM-resident across grid.
    resident = lambda shape: pl.BlockSpec(shape, lambda i: (0, 0))

    out_t = pl.pallas_call(
        policy_discrete_kernel,
        out_shape=jax.ShapeDtypeStruct((action_dim, B), jnp.float32),
        grid=grid,
        in_specs=[
            pl.BlockSpec((tb, state_dim), lambda i: (i, 0)),   # natural-layout x tile
            resident(w1.shape), resident(b1.shape),
            resident(w2.shape), resident(b2.shape),
            resident(w3.shape), resident(b3.shape),
        ],
        out_specs=pl.BlockSpec((action_dim, tb), lambda i: (0, i)),
        compiler_params=pltpu.CompilerParams(
            dimension_semantics=("parallel",),        # megacore split on v7x (needs >=2 steps)
            vmem_limit_bytes=48 * 1024 * 1024,        # headroom under v7x's 64 MiB
        ),
    )(x, w1, b1, w2, b2, w3, b3)

    if action_major:
        return out_t                 # zero-cost: consume (action_dim, B) directly
    return out_t.T                   # PyTorch-compatible (B, action_dim)


def init_params(key, state_dim, hidden_dim, action_dim):
    """nn.Linear default init (U[-1/sqrt(fan_in), 1/sqrt(fan_in)]).
    Weights in PyTorch layout (out, in); biases as (out, 1) columns."""
    def linear(k, fan_in, fan_out):
        kw, kb = jax.random.split(k)
        bound = 1.0 / math.sqrt(fan_in)
        w = jax.random.uniform(kw, (fan_out, fan_in), jnp.float32, -bound, bound)
        b = jax.random.uniform(kb, (fan_out, 1), jnp.float32, -bound, bound)
        return w, b

    k1, k2, k3 = jax.random.split(key, 3)
    w1, b1 = linear(k1, state_dim, hidden_dim)
    w2, b2 = linear(k2, hidden_dim, hidden_dim)
    w3, b3 = linear(k3, hidden_dim, action_dim)
    return {"w1": w1, "b1": b1, "w2": w2, "b2": b2, "w3": w3, "b3": b3}


def reference_forward(x, p):
    """Pure-JAX reference in the natural (B, features) layout."""
    h = x @ p["w1"].T + p["b1"].T
    h = jnp.where(h > 0, h, 0.01 * h)
    h = h @ p["w2"].T + p["b2"].T
    h = jnp.where(h > 0, h, 0.01 * h)
    logits = h @ p["w3"].T + p["b3"].T
    return jax.nn.softmax(logits, axis=-1)


if __name__ == "__main__":
    state_dim, hidden_dim, action_dim = 16, 32, 8
    batch = 200  # not a tile multiple -> exercises the ragged last block path

    key = jax.random.PRNGKey(0)
    kx, kp = jax.random.split(key)
    x = jax.random.normal(kx, (batch, state_dim), dtype=jnp.float32)
    params = init_params(kp, state_dim, hidden_dim, action_dim)

    # Small block_b so the test runs a multi-step grid; production default is 8192.
    out = policy_discrete_forward(x, params, block_b=128)
    out = jax.block_until_ready(out)

    ref = reference_forward(x, params)
    assert out.shape == (batch, action_dim)
    assert jnp.allclose(jnp.sum(out, axis=-1), 1.0, atol=1e-4)
    assert jnp.allclose(out, ref, atol=5e-3, rtol=5e-3)

    print("KERNEL_OK")
</pallas_src>

<mosaic_0001>
module attributes {stable_mosaic.version = 11 : i64} {
  func.func @policy_discrete_kernel(%arg0: i32, %arg1: memref<128x16xf32, #tpu.memory_space<vmem>>, %arg2: memref<32x16xf32, #tpu.memory_space<vmem>>, %arg3: memref<32x1xf32, #tpu.memory_space<vmem>>, %arg4: memref<32x32xf32, #tpu.memory_space<vmem>>, %arg5: memref<32x1xf32, #tpu.memory_space<vmem>>, %arg6: memref<8x32xf32, #tpu.memory_space<vmem>>, %arg7: memref<8x1xf32, #tpu.memory_space<vmem>>, %arg8: memref<8x128xf32, #tpu.memory_space<vmem>>) attributes {dimension_semantics = [#tpu.dimension_semantics<parallel>], iteration_bounds = array<i64: 2>, scalar_prefetch = 0 : i64, scratch_operands = 0 : i64, tpu.core_type = #tpu.core_type<tc>, window_params = [{transform_indices = @transform_0, window_bounds = array<i64: 128, 16>}, {pipeline_mode = #tpu.pipeline_mode<synchronous>, transform_indices = @transform_1, window_bounds = array<i64: 32, 16>}, {pipeline_mode = #tpu.pipeline_mode<synchronous>, transform_indices = @transform_2, window_bounds = array<i64: 32, 1>}, {pipeline_mode = #tpu.pipeline_mode<synchronous>, transform_indices = @transform_3, window_bounds = array<i64: 32, 32>}, {pipeline_mode = #tpu.pipeline_mode<synchronous>, transform_indices = @transform_4, window_bounds = array<i64: 32, 1>}, {pipeline_mode = #tpu.pipeline_mode<synchronous>, transform_indices = @transform_5, window_bounds = array<i64: 8, 32>}, {pipeline_mode = #tpu.pipeline_mode<synchronous>, transform_indices = @transform_6, window_bounds = array<i64: 8, 1>}, {transform_indices = @transform_7, window_bounds = array<i64: 8, 128>}]} {
    %c0 = arith.constant 0 : index
    %c0_0 = arith.constant 0 : index
    %0 = vector.load %arg2[%c0, %c0_0] : memref<32x16xf32, #tpu.memory_space<vmem>>, vector<32x16xf32>
    %c0_1 = arith.constant 0 : index
    %c0_2 = arith.constant 0 : index
    %1 = vector.load %arg1[%c0_1, %c0_2] : memref<128x16xf32, #tpu.memory_space<vmem>>, vector<128x16xf32>
    %cst = arith.constant dense<0.000000e+00> : vector<32x128xf32>
    %2 = tpu.matmul %0, %1, %cst {dimension_numbers = #tpu.dot_dimension_numbers<[1], [1], [0], [0], [0, 0, 1, 0], [], []>} : vector<32x16xf32>, vector<128x16xf32>, vector<32x128xf32> -> vector<32x128xf32>
    %c0_3 = arith.constant 0 : index
    %c0_4 = arith.constant 0 : index
    %3 = vector.load %arg3[%c0_3, %c0_4] : memref<32x1xf32, #tpu.memory_space<vmem>>, vector<32x1xf32>
    %4 = vector.broadcast %3 : vector<32x1xf32> to vector<32x128xf32>
    %5 = arith.addf %2, %4 : vector<32x128xf32>
    %cst_5 = arith.constant 0.00999999977 : f32
    %6 = vector.broadcast %cst_5 : f32 to vector<32x128xf32>
    %7 = arith.mulf %6, %5 : vector<32x128xf32>
    %8 = arith.maximumf %5, %7 : vector<32x128xf32>
    %c0_6 = arith.constant 0 : index
    %c0_7 = arith.constant 0 : index
    %9 = vector.load %arg4[%c0_6, %c0_7] : memref<32x32xf32, #tpu.memory_space<vmem>>, vector<32x32xf32>
    %cst_8 = arith.constant dense<0.000000e+00> : vector<32x128xf32>
    %10 = tpu.matmul %9, %8, %cst_8 {dimension_numbers = #tpu.dot_dimension_numbers<[1], [0], [0], [1], [0, 0, 1, 1], [], []>} : vector<32x32xf32>, vector<32x128xf32>, vector<32x128xf32> -> vector<32x128xf32>
    %c0_9 = arith.constant 0 : index
    %c0_10 = arith.constant 0 : index
    %11 = vector.load %arg5[%c0_9, %c0_10] : memref<32x1xf32, #tpu.memory_space<vmem>>, vector<32x1xf32>
    %12 = vector.broadcast %11 : vector<32x1xf32> to vector<32x128xf32>
    %13 = arith.addf %10, %12 : vector<32x128xf32>
    %cst_11 = arith.constant 0.00999999977 : f32
    %14 = vector.broadcast %cst_11 : f32 to vector<32x128xf32>
    %15 = arith.mulf %14, %13 : vector<32x128xf32>
    %16 = arith.maximumf %13, %15 : vector<32x128xf32>
    %c0_12 = arith.constant 0 : index
    %c0_13 = arith.constant 0 : index
    %17 = vector.load %arg6[%c0_12, %c0_13] : memref<8x32xf32, #tpu.memory_space<vmem>>, vector<8x32xf32>
    %cst_14 = arith.constant dense<0.000000e+00> : vector<8x128xf32>
    %18 = tpu.matmul %17, %16, %cst_14 {dimension_numbers = #tpu.dot_dimension_numbers<[1], [0], [0], [1], [0, 0, 1, 1], [], []>} : vector<8x32xf32>, vector<32x128xf32>, vector<8x128xf32> -> vector<8x128xf32>
    %c0_15 = arith.constant 0 : index
    %c0_16 = arith.constant 0 : index
    %19 = vector.load %arg7[%c0_15, %c0_16] : memref<8x1xf32, #tpu.memory_space<vmem>>, vector<8x1xf32>
    %20 = vector.broadcast %19 : vector<8x1xf32> to vector<8x128xf32>
    %21 = arith.addf %18, %20 : vector<8x128xf32>
    %cst_17 = arith.constant dense<0xFF800000> : vector<128xf32>
    %22 = vector.multi_reduction <maximumf>, %21, %cst_17 [0] : vector<8x128xf32> to vector<128xf32>
    %23 = vector.shape_cast %22 : vector<128xf32> to vector<1x128xf32>
    %24 = vector.broadcast %23 : vector<1x128xf32> to vector<8x128xf32>
    %25 = arith.subf %21, %24 : vector<8x128xf32>
    %26 = math.exp %25 : vector<8x128xf32>
    %cst_18 = arith.constant dense<0.000000e+00> : vector<128xf32>
    %27 = vector.multi_reduction <add>, %26, %cst_18 [0] : vector<8x128xf32> to vector<128xf32>
    %28 = vector.shape_cast %27 : vector<128xf32> to vector<1x128xf32>
    %cst_19 = arith.constant 1.000000e+00 : f32
    %29 = vector.broadcast %cst_19 : f32 to vector<1x128xf32>
    %30 = arith.divf %29, %28 : vector<1x128xf32>
    %31 = vector.broadcast %30 : vector<1x128xf32> to vector<8x128xf32>
    %32 = arith.mulf %26, %31 : vector<8x128xf32>
    %c0_20 = arith.constant 0 : index
    %c0_21 = arith.constant 0 : index
    %33 = vector.load %arg8[%c0_20, %c0_21] : memref<8x128xf32, #tpu.memory_space<vmem>>, vector<8x128xf32>
    tpu.vector_store %arg8[%c0_20, %c0_21], %32 {strides = array<i32>} : memref<8x128xf32, #tpu.memory_space<vmem>>, vector<8x128xf32>,
    return
  }
  func.func @transform_0(%arg0: i32) -> (i32, i32) {
    %c0_i32 = arith.constant 0 : i32
    %c0_i32_0 = arith.constant 0 : i32
    return %arg0, %c0_i32 : i32, i32
  }
  func.func @transform_1(%arg0: i32) -> (i32, i32) {
    %c0_i32 = arith.constant 0 : i32
    %c0_i32_0 = arith.constant 0 : i32
    %c0_i32_1 = arith.constant 0 : i32
    return %c0_i32, %c0_i32_0 : i32, i32
  }
  func.func @transform_2(%arg0: i32) -> (i32, i32) {
    %c0_i32 = arith.constant 0 : i32
    %c0_i32_0 = arith.constant 0 : i32
    %c0_i32_1 = arith.constant 0 : i32
    return %c0_i32, %c0_i32_0 : i32, i32
  }
  func.func @transform_3(%arg0: i32) -> (i32, i32) {
    %c0_i32 = arith.constant 0 : i32
    %c0_i32_0 = arith.constant 0 : i32
    %c0_i32_1 = arith.constant 0 : i32
    return %c0_i32, %c0_i32_0 : i32, i32
  }
  func.func @transform_4(%arg0: i32) -> (i32, i32) {
    %c0_i32 = arith.constant 0 : i32
    %c0_i32_0 = arith.constant 0 : i32
    %c0_i32_1 = arith.constant 0 : i32
    return %c0_i32, %c0_i32_0 : i32, i32
  }
  func.func @transform_5(%arg0: i32) -> (i32, i32) {
    %c0_i32 = arith.constant 0 : i32
    %c0_i32_0 = arith.constant 0 : i32
    %c0_i32_1 = arith.constant 0 : i32
    return %c0_i32, %c0_i32_0 : i32, i32
  }
  func.func @transform_6(%arg0: i32) -> (i32, i32) {
    %c0_i32 = arith.constant 0 : i32
    %c0_i32_0 = arith.constant 0 : i32
    %c0_i32_1 = arith.constant 0 : i32
    return %c0_i32, %c0_i32_0 : i32, i32
  }
  func.func @transform_7(%arg0: i32) -> (i32, i32) {
    %c0_i32 = arith.constant 0 : i32
    %c0_i32_0 = arith.constant 0 : i32
    return %c0_i32, %arg0 : i32, i32
  }
}

</mosaic_0001>

<llo_original>
// kernel: tpu_custom_call.1
$region0: #{tpu_custom_call.1}
  #allocation0 [shape = 'u32[]', space=smem, size = 0x4, offset = 0x4, fixed_abs, tag = 'smem constant byte address 0x4 - core index']
  #allocation1 [shape = 'u32[144,128]{1,0:T(1,128)}', space=vmem, size = 0x12000, scoped, tag = 'internal scratch']
  %s0 = inlined_call_operand.vmem [shape: f32[200,16], index: 0, kind: input, shape index: {}]
  %s1 = inlined_call_operand.vmem [shape: f32[32,16], index: 1, kind: input, shape index: {}]
  %s2 = inlined_call_operand.vmem [shape: f32[32,1], index: 2, kind: input, shape index: {}]
  %s3 = inlined_call_operand.vmem [shape: f32[32,32], index: 3, kind: input, shape index: {}]
  %s4 = inlined_call_operand.vmem [shape: f32[32,1], index: 4, kind: input, shape index: {}]
  %s5 = inlined_call_operand.vmem [shape: f32[8,32], index: 5, kind: input, shape index: {}]
  %s6 = inlined_call_operand.vmem [shape: f32[8,1], index: 6, kind: input, shape index: {}]
  %s7 = inlined_call_operand.hbm [shape: f32[8,200], index: 7, kind: output, shape index: {}]
  %s8 = sld [smem:[#allocation0]]
  $region61: #{tpu_custom_call.1} parent=0
    _
  %s10 = ssub.s32 1, %s8
  %s11 = scalar_select 0, %s10, %s8
  $region1: #{tpu_custom_call.1} parent=0
    #allocation2 [shape = 'u8[8192]{0}', space=vmem, size = 0x2000, scoped, tag = 'output window, operand 0']
    #allocation3 [shape = 's32[2]{0}', space=sflag, size = 0x8, scoped, tag = 'scoped memory for tpu_custom_call.1']
    %12 = vsyncpa [#allocation3], 0
    %s13 = scalar_lea.sflag [#allocation3], 1
    %14 = vsyncpa %s13, 0
    loop: start=0, step=1, limit=4
    $region2: #{tpu_custom_call.1} parent=1 // loop_pre_header
      _
    $region3: #{tpu_custom_call.1} parent=1 // loop_header
      %s16 = sphi 0, %s20
      %p17 = scmp.ge.s32.totalorder %s16, 4
      %s26 = sphi 0, %s28
      %s29 = sphi 0, %s26
      %s30 = sphi 0, %s29
      %s46 = sphi 0, %s30
      %s50 = sphi 0, %s50
      %s52 = sphi 0, %s50
      %s53 = sphi 0, %s52
      %s67 = sphi 0, %s53
      %s71 = sphi 0, %s71
      %s73 = sphi 0, %s71
      %s74 = sphi 0, %s73
      %s88 = sphi 0, %s74
      %s92 = sphi 0, %s92
      %s94 = sphi 0, %s92
      %s95 = sphi 0, %s94
      %s109 = sphi 0, %s95
      %s113 = sphi 0, %s113
      %s115 = sphi 0, %s113
      %s116 = sphi 0, %s115
      %s130 = sphi 0, %s116
      %s134 = sphi 0, %s134
      %s136 = sphi 0, %s134
      %s137 = sphi 0, %s136
      %s151 = sphi 0, %s137
      %s155 = sphi 0, %s155
      %s157 = sphi 0, %s155
      %s158 = sphi 0, %s157
      %s172 = sphi 0, %s158
      %s178 = sphi 0, %s180
      %s181 = sphi 0, %s178
      %s182 = sphi 0, %s181
      %s198 = sphi 0, %s182
    $region4: #{tpu_custom_call.1} parent=1 // loop_header_branch
      %19 = sbr.rel (%p17) target = $region8
    $region5: #{tpu_custom_call.1} parent=1 // loop_body
      %s21 = ssub.s32 %s16, 1
      %s22 = ssub.s32 %s16, 2
      %s23 = sadd.s32 %s16, 1
      %s24 = ssub.s32 %s16, %s23
      %p25 = scmp.eq.s32.totalorder %s24, 0
      %s27 = sadd.s32 %s26, 1
      %s28 = scalar_select %p25, %s26, %s27
      %p31 = pneg %p25
      %p32 = scmp.eq.s32.totalorder %s16, 1
      %p33 = por %p31, %p32
      %p34 = scmp.ne.s32.totalorder %s26, %s29
      %p35 = scmp.eq.s32.totalorder %s16, 0
      %p36 = por %p34, %p35
      %p37 = scmp.ne.s32.totalorder %s26, %s29
      %p38 = scmp.eq.s32.totalorder %s21, 1
      %p39 = por %p37, %p38
      %p40 = scmp.ne.s32.totalorder %s29, %s30
      %p41 = scmp.eq.s32.totalorder %s21, 0
      %p42 = por %p40, %p41
      %p43 = scmp.ne.s32.totalorder %s29, %s30
      %p44 = scmp.eq.s32.totalorder %s22, 1
      %p45 = por %p43, %p44
      %p47 = scmp.ne.s32.totalorder %s30, %s46
      %p48 = scmp.eq.s32.totalorder %s22, 0
      %p49 = por %p47, %p48
      %s51 = sadd.s32 %s50, 1
      %p54 = scmp.eq.s32.totalorder %s16, 1
      %p55 = scmp.ne.s32.totalorder %s50, %s52
      %p56 = scmp.eq.s32.totalorder %s16, 0
      %p57 = por %p55, %p56
      %p58 = scmp.ne.s32.totalorder %s50, %s52
      %p59 = scmp.eq.s32.totalorder %s21, 1
      %p60 = por %p58, %p59
      %p61 = scmp.ne.s32.totalorder %s52, %s53
      %p62 = scmp.eq.s32.totalorder %s21, 0
      %p63 = por %p61, %p62
      %p64 = scmp.ne.s32.totalorder %s52, %s53
      %p65 = scmp.eq.s32.totalorder %s22, 1
      %p66 = por %p64, %p65
      %p68 = scmp.ne.s32.totalorder %s53, %s67
      %p69 = scmp.eq.s32.totalorder %s22, 0
      %p70 = por %p68, %p69
      %s72 = sadd.s32 %s71, 1
      %p75 = scmp.eq.s32.totalorder %s16, 1
      %p76 = scmp.ne.s32.totalorder %s71, %s73
      %p77 = scmp.eq.s32.totalorder %s16, 0
      %p78 = por %p76, %p77
      %p79 = scmp.ne.s32.totalorder %s71, %s73
      %p80 = scmp.eq.s32.totalorder %s21, 1
      %p81 = por %p79, %p80
      %p82 = scmp.ne.s32.totalorder %s73, %s74
      %p83 = scmp.eq.s32.totalorder %s21, 0
      %p84 = por %p82, %p83
      %p85 = scmp.ne.s32.totalorder %s73, %s74
      %p86 = scmp.eq.s32.totalorder %s22, 1
      %p87 = por %p85, %p86
      %p89 = scmp.ne.s32.totalorder %s74, %s88
      %p90 = scmp.eq.s32.totalorder %s22, 0
      %p91 = por %p89, %p90
      %s93 = sadd.s32 %s92, 1
      %p96 = scmp.eq.s32.totalorder %s16, 1
      %p97 = scmp.ne.s32.totalorder %s92, %s94
      %p98 = scmp.eq.s32.totalorder %s16, 0
      %p99 = por %p97, %p98
      %p100 = scmp.ne.s32.totalorder %s92, %s94
      %p101 = scmp.eq.s32.totalorder %s21, 1
      %p102 = por %p100, %p101
      %p103 = scmp.ne.s32.totalorder %s94, %s95
      %p104 = scmp.eq.s32.totalorder %s21, 0
      %p105 = por %p103, %p104
      %p106 = scmp.ne.s32.totalorder %s94, %s95
      %p107 = scmp.eq.s32.totalorder %s22, 1
      %p108 = por %p106, %p107
      %p110 = scmp.ne.s32.totalorder %s95, %s109
      %p111 = scmp.eq.s32.totalorder %s22, 0
      %p112 = por %p110, %p111
      %s114 = sadd.s32 %s113, 1
      %p117 = scmp.eq.s32.totalorder %s16, 1
      %p118 = scmp.ne.s32.totalorder %s113, %s115
      %p119 = scmp.eq.s32.totalorder %s16, 0
      %p120 = por %p118, %p119
      %p121 = scmp.ne.s32.totalorder %s113, %s115
      %p122 = scmp.eq.s32.totalorder %s21, 1
      %p123 = por %p121, %p122
      %p124 = scmp.ne.s32.totalorder %s115, %s116
      %p125 = scmp.eq.s32.totalorder %s21, 0
      %p126 = por %p124, %p125
      %p127 = scmp.ne.s32.totalorder %s115, %s116
      %p128 = scmp.eq.s32.totalorder %s22, 1
      %p129 = por %p127, %p128
      %p131 = scmp.ne.s32.totalorder %s116, %s130
      %p132 = scmp.eq.s32.totalorder %s22, 0
      %p133 = por %p131, %p132
      %s135 = sadd.s32 %s134, 1
      %p138 = scmp.eq.s32.totalorder %s16, 1
      %p139 = scmp.ne.s32.totalorder %s134, %s136
      %p140 = scmp.eq.s32.totalorder %s16, 0
      %p141 = por %p139, %p140
      %p142 = scmp.ne.s32.totalorder %s134, %s136
      %p143 = scmp.eq.s32.totalorder %s21, 1
      %p144 = por %p142, %p143
      %p145 = scmp.ne.s32.totalorder %s136, %s137
      %p146 = scmp.eq.s32.totalorder %s21, 0
      %p147 = por %p145, %p146
      %p148 = scmp.ne.s32.totalorder %s136, %s137
      %p149 = scmp.eq.s32.totalorder %s22, 1
      %p150 = por %p148, %p149
      %p152 = scmp.ne.s32.totalorder %s137, %s151
      %p153 = scmp.eq.s32.totalorder %s22, 0
      %p154 = por %p152, %p153
      %s156 = sadd.s32 %s155, 1
      %p159 = scmp.eq.s32.totalorder %s16, 1
      %p160 = scmp.ne.s32.totalorder %s155, %s157
      %p161 = scmp.eq.s32.totalorder %s16, 0
      %p162 = por %p160, %p161
      %p163 = scmp.ne.s32.totalorder %s155, %s157
      %p164 = scmp.eq.s32.totalorder %s21, 1
      %p165 = por %p163, %p164
      %p166 = scmp.ne.s32.totalorder %s157, %s158
      %p167 = scmp.eq.s32.totalorder %s21, 0
      %p168 = por %p166, %p167
      %p169 = scmp.ne.s32.totalorder %s157, %s158
      %p170 = scmp.eq.s32.totalorder %s22, 1
      %p171 = por %p169, %p170
      %p173 = scmp.ne.s32.totalorder %s158, %s172
      %p174 = scmp.eq.s32.totalorder %s22, 0
      %p175 = por %p173, %p174
      %s176 = ssub.s32 %s16, %s23
      %p177 = scmp.eq.s32.totalorder %s176, 0
      %s179 = sadd.s32 %s178, 1
      %s180 = scalar_select %p177, %s178, %s179
      %p183 = pneg %p177
      %p184 = scmp.eq.s32.totalorder %s16, 1
      %p185 = por %p183, %p184
      %p186 = scmp.ne.s32.totalorder %s178, %s181
      %p187 = scmp.eq.s32.totalorder %s16, 0
      %p188 = por %p186, %p187
      %p189 = scmp.ne.s32.totalorder %s178, %s181
      %p190 = scmp.eq.s32.totalorder %s21, 1
      %p191 = por %p189, %p190
      %p192 = scmp.ne.s32.totalorder %s181, %s182
      %p193 = scmp.eq.s32.totalorder %s21, 0
      %p194 = por %p192, %p193
      %p195 = scmp.ne.s32.totalorder %s181, %s182
      %p196 = scmp.eq.s32.totalorder %s22, 1
      %p197 = por %p195, %p196
      %p199 = scmp.ne.s32.totalorder %s182, %s198
      %p200 = scmp.eq.s32.totalorder %s22, 0
      %p201 = por %p199, %p200
      %p202 = scmp.le.s32.totalorder 1, %s16
      %p203 = scmp.lt.s32.totalorder %s16, 3
      %p204 = pnand %p202, %p203
      %p205 = pneg %p204
      // Predicated region
      $region9: #{tpu_custom_call.1} parent=5 // pred_check
        _
      $region10: #{tpu_custom_call.1} parent=5 // pred_check_branch
        %207 = sbr.rel (%p204) target = $region12
      $region11: #{tpu_custom_call.1} parent=5 // pred_region
        %s208 = ssub.s32 %s16, 1
        // Predicated region
        $region13: #{tpu_custom_call.1} parent=11 // pred_check
          %p209 = pneg %p63
        $region14: #{tpu_custom_call.1} parent=11 // pred_check_branch
          %211 = sbr.rel (%p209) target = $region16
        $region15: #{tpu_custom_call.1} parent=11 // pred_region
          _
        $region16: #{tpu_custom_call.1} parent=11 // pred_fallthru
          _
        // Predicated region
        $region17: #{tpu_custom_call.1} parent=11 // pred_check
          %p212 = pneg %p84
        $region18: #{tpu_custom_call.1} parent=11 // pred_check_branch
          %214 = sbr.rel (%p212) target = $region20
        $region19: #{tpu_custom_call.1} parent=11 // pred_region
          _
        $region20: #{tpu_custom_call.1} parent=11 // pred_fallthru
          _
        // Predicated region
        $region21: #{tpu_custom_call.1} parent=11 // pred_check
          %p215 = pneg %p105
        $region22: #{tpu_custom_call.1} parent=11 // pred_check_branch
          %217 = sbr.rel (%p215) target = $region24
        $region23: #{tpu_custom_call.1} parent=11 // pred_region
          _
        $region24: #{tpu_custom_call.1} parent=11 // pred_fallthru
          _
        // Predicated region
        $region25: #{tpu_custom_call.1} parent=11 // pred_check
          %p218 = pneg %p126
        $region26: #{tpu_custom_call.1} parent=11 // pred_check_branch
          %220 = sbr.rel (%p218) target = $region28
        $region27: #{tpu_custom_call.1} parent=11 // pred_region
          _
        $region28: #{tpu_custom_call.1} parent=11 // pred_fallthru
          _
        // Predicated region
        $region29: #{tpu_custom_call.1} parent=11 // pred_check
          %p221 = pneg %p147
        $region30: #{tpu_custom_call.1} parent=11 // pred_check_branch
          %223 = sbr.rel (%p221) target = $region32
        $region31: #{tpu_custom_call.1} parent=11 // pred_region
          _
        $region32: #{tpu_custom_call.1} parent=11 // pred_fallthru
          _
        // Predicated region
        $region33: #{tpu_custom_call.1} parent=11 // pred_check
          %p224 = pneg %p168
        $region34: #{tpu_custom_call.1} parent=11 // pred_check_branch
          %226 = sbr.rel (%p224) target = $region36
        $region35: #{tpu_custom_call.1} parent=11 // pred_region
          _
        $region36: #{tpu_custom_call.1} parent=11 // pred_fallthru
          _
      $region12: #{tpu_custom_call.1} parent=5 // pred_fallthru
        _
      %p227 = scmp.lt.s32.totalorder %s16, 2
      // Predicated region
      $region37: #{tpu_custom_call.1} parent=5 // pred_check
        %p228 = pneg %p227
      $region38: #{tpu_custom_call.1} parent=5 // pred_check_branch
        %230 = sbr.rel (%p228) target = $region40
      $region39: #{tpu_custom_call.1} parent=5 // pred_region
        // Predicated region
        $region41: #{tpu_custom_call.1} parent=39 // pred_check
          %p231 = pneg %p36
        $region42: #{tpu_custom_call.1} parent=39 // pred_check_branch
          %233 = sbr.rel (%p231) target = $region44
        $region43: #{tpu_custom_call.1} parent=39 // pred_region
          %s234 = smul.u32 16, %s16
          %s235 = ssub.s32 25, %s234
          %p236 = scmp.lt.s32.totalorder %s235, 16
          %s237 = scalar_select %p236, %s235, 16
          %s238 = smul.u32 128, %s237
          %p239 = scmp.lt.s32.totalorder %s234, 24
          %s240 = scalar_select %p239, %s234, 24
          %s241 = smul.addr %s240, 8
          %s242 = scalar_lea.vmem %s0, %s241
          %s243 = smul.u32 16, %s16
          %s244 = ssub.s32 25, %s243
          %p245 = scmp.lt.s32.totalorder %s244, 16
          %s246 = scalar_select %p245, %s244, 16
          %s247 = smul.u32 128, %s246
        $region44: #{tpu_custom_call.1} parent=39 // pred_fallthru
          _
      $region40: #{tpu_custom_call.1} parent=5 // pred_fallthru
        _
      %p248 = scmp.le.s32.totalorder 1, %s16
      %p249 = scmp.lt.s32.totalorder %s16, 3
      %p250 = pnand %p248, %p249
      %p251 = pneg %p250
      // Predicated region
      $region45: #{tpu_custom_call.1} parent=5 // pred_check
        _
      $region46: #{tpu_custom_call.1} parent=5 // pred_check_branch
        %253 = sbr.rel (%p250) target = $region48
      $region47: #{tpu_custom_call.1} parent=5 // pred_region
        %s254 = ssub.s32 %s16, 1
        %s255 = smul.u32 16, %s21
        %s256 = ssub.s32 25, %s255
        %p257 = scmp.lt.s32.totalorder %s256, 16
        %s258 = scalar_select %p257, %s256, 16
        %s259 = smul.u32 128, %s258
        %p260 = scmp.lt.s32.totalorder %s255, 24
        %s261 = scalar_select %p260, %s255, 24
        %s262 = smul.addr %s261, 8
        %s263 = scalar_lea.vmem %s0, %s262
        %p264 = pneg %p42
        %p265 = pneg %p39
        %p266 = pneg %p63
        %p267 = pneg %p60
        %p268 = pneg %p84
        %p269 = pneg %p81
        %p270 = pneg %p105
        %p271 = pneg %p102
        %p272 = pneg %p126
        %p273 = pneg %p123
        %p274 = pneg %p147
        %p275 = pneg %p144
        %p276 = pneg %p168
        %p277 = pneg %p165
        %p278 = pneg %p194
        %p279 = pneg %p191
        %s280 = sand.u32 %s181, 1
        %s281 = scalar_lea.sflag [#allocation3], %s280
        %s282 = sand.u32 %s181, 1
        %s283 = smul.addr %s282, 8
        %s284 = scalar_lea.vmem [#allocation2], %s283
        %s285 = smul.u32 16, %s21
        %s286 = ssub.s32 25, %s285
        %p287 = scmp.lt.s32.totalorder %s286, 16
        %s288 = scalar_select %p287, %s286, 16
        %s289 = smul.u32 128, %s288
        %p290 = scmp.lt.s32.totalorder %s285, 24
        %s291 = scalar_select %p290, %s285, 24
        %s292 = smul.addr %s291, 8
        %s293 = scalar_lea.vmem %s0, %s292
        %s294 = smul.u32 16, %s21
        %s295 = ssub.s32 25, %s294
        %p296 = scmp.lt.s32.totalorder %s295, 16
        %s297 = scalar_select %p296, %s295, 16
        %s298 = smul.u32 128, %s297
        %v299 = vld [vmem:[%s1] sm:$0xff]
        %v300 = vld [vmem:[%s1 + $0x8] sm:$0xff]
        %v301 = vld [vmem:[%s1 + $0x10] sm:$0xff]
        %v302 = vld [vmem:[%s1 + $0x18] sm:$0xff]
        %v303 = vld [vmem:[%s293] sm:$0xff]
        %v304 = vld [vmem:[%s293 + $0x8] sm:$0xff]
        %v305 = vld [vmem:[%s293 + $0x10] sm:$0xff]
        %v306 = vld [vmem:[%s293 + $0x18] sm:$0xff]
        %v307 = vld [vmem:[%s293 + $0x20] sm:$0xff]
        %v308 = vld [vmem:[%s293 + $0x28] sm:$0xff]
        %v309 = vld [vmem:[%s293 + $0x30] sm:$0xff]
        %v310 = vld [vmem:[%s293 + $0x38] sm:$0xff]
        %v311 = vld [vmem:[%s293 + $0x40] sm:$0xff]
        %v312 = vld [vmem:[%s293 + $0x48] sm:$0xff]
        %v313 = vld [vmem:[%s293 + $0x50] sm:$0xff]
        %v314 = vld [vmem:[%s293 + $0x58] sm:$0xff]
        %v315 = vld [vmem:[%s293 + $0x60] sm:$0xff]
        %v316 = vld [vmem:[%s293 + $0x68] sm:$0xff]
        %v317 = vld [vmem:[%s293 + $0x70] sm:$0xff]
        %v318 = vld [vmem:[%s293 + $0x78] sm:$0xff]
        %v319 = vld [vmem:[%s2] sm:$0xff]
        %v320 = vld [vmem:[%s2 + $0x8] sm:$0xff]
        %v321 = vld [vmem:[%s2 + $0x10] sm:$0xff]
        %v322 = vld [vmem:[%s2 + $0x18] sm:$0xff]
        %324 = vset.pattern.permute.xlu0 0
        %325 = vperm.xlu0 %324, %v319
        %v326 = vpop.permute.xlu0 %325
        %329 = vset.pattern.permute.xlu0 0
        %330 = vperm.xlu0 %329, %v320
        %v331 = vpop.permute.xlu0 %330
        %334 = vset.pattern.permute.xlu0 0
        %335 = vperm.xlu0 %334, %v321
        %v336 = vpop.permute.xlu0 %335
        %339 = vset.pattern.permute.xlu0 0
        %340 = vperm.xlu0 %339, %v322
        %v341 = vpop.permute.xlu0 %340
        %vm343 = vcmask 130048
        %v345 = vsel %vm343, %v299, 0
        %v348 = vsel %vm343, %v300, 0
        %v351 = vsel %vm343, %v301, 0
        %v354 = vsel %vm343, %v302, 0
        %v357 = vsel %vm343, %v303, 0
        %v360 = vsel %vm343, %v304, 0
        %v363 = vsel %vm343, %v305, 0
        %v366 = vsel %vm343, %v306, 0
        %v369 = vsel %vm343, %v307, 0
        %v372 = vsel %vm343, %v308, 0
        %v375 = vsel %vm343, %v309, 0
        %v378 = vsel %vm343, %v310, 0
        %v381 = vsel %vm343, %v311, 0
        %v384 = vsel %vm343, %v312, 0
        %v387 = vsel %vm343, %v313, 0
        %v390 = vsel %vm343, %v314, 0
        %v393 = vsel %vm343, %v315, 0
        %v396 = vsel %vm343, %v316, 0
        %v399 = vsel %vm343, %v317, 0
        %v402 = vsel %vm343, %v318, 0
        %404 = vmatprep.subr.mxu0 0.0
        %405 = vmatpush1.xpose.msra.mxu0 %v357
        %406 = vmatprep.subr.mxu0 0.0
        %407 = vmatpush1.xpose.msra.mxu0 %v360
        %408 = vmatprep.subr.mxu0 0.0
        %409 = vmatpush1.xpose.msra.mxu0 %v363
        %410 = vmatprep.subr.mxu0 0.0
        %411 = vmatpush1.xpose.msra.mxu0 %v366
        %412 = vmatprep.subr.mxu0 0.0
        %413 = vmatpush1.xpose.msra.mxu0 %v369
        %414 = vmatprep.subr.mxu0 0.0
        %415 = vmatpush1.xpose.msra.mxu0 %v372
        %416 = vmatprep.subr.mxu0 0.0
        %417 = vmatpush1.xpose.msra.mxu0 %v375
        %418 = vmatprep.subr.mxu0 0.0
        %419 = vmatpush1.xpose.msra.mxu0 %v378
        %420 = vmatprep.subr.mxu0 0.0
        %421 = vmatpush1.xpose.msra.mxu0 %v381
        %422 = vmatprep.subr.mxu0 0.0
        %423 = vmatpush1.xpose.msra.mxu0 %v384
        %424 = vmatprep.subr.mxu0 0.0
        %425 = vmatpush1.xpose.msra.mxu0 %v387
        %426 = vmatprep.subr.mxu0 0.0
        %427 = vmatpush1.xpose.msra.mxu0 %v390
        %428 = vmatprep.subr.mxu0 0.0
        %429 = vmatpush1.xpose.msra.mxu0 %v393
        %430 = vmatprep.subr.mxu0 0.0
        %431 = vmatpush1.xpose.msra.mxu0 %v396
        %432 = vmatprep.subr.mxu0 0.0
        %433 = vmatpush1.xpose.msra.mxu0 %v399
        %434 = vmatprep.subr.mxu0 0.0
        %435 = vmatpush1.xpose.msra.mxu0 %v402
        %436 = vmatprep.subr.mxu0 0.0
        %437 = vmatpush1.xpose.msra.mxu0 0.0
        %438 = vmatprep.subr.mxu0 0.0
        %439 = vmatpush1.xpose.msra.mxu0 0.0
        %440 = vmatprep.subr.mxu0 0.0
        %441 = vmatpush1.xpose.msra.mxu0 0.0
        %442 = vmatprep.subr.mxu0 0.0
        %443 = vmatpush1.xpose.msra.mxu0 0.0
        %444 = vmatprep.subr.mxu0 0.0
        %445 = vmatpush1.xpose.msra.mxu0 0.0
        %446 = vmatprep.subr.mxu0 0.0
        %447 = vmatpush1.xpose.msra.mxu0 0.0
        %448 = vmatprep.subr.mxu0 0.0
        %449 = vmatpush1.xpose.msra.mxu0 0.0
        %450 = vmatprep.subr.mxu0 0.0
        %451 = vmatpush1.xpose.msra.mxu0 0.0
        %452 = vmatprep.subr.mxu0 0.0
        %453 = vmatpush1.xpose.msra.mxu0 0.0
        %454 = vmatprep.subr.mxu0 0.0
        %455 = vmatpush1.xpose.msra.mxu0 0.0
        %456 = vmatprep.subr.mxu0 0.0
        %457 = vmatpush1.xpose.msra.mxu0 0.0
        %458 = vmatprep.subr.mxu0 0.0
        %459 = vmatpush1.xpose.msra.mxu0 0.0
        %460 = vmatprep.subr.mxu0 0.0
        %461 = vmatpush1.xpose.msra.mxu0 0.0
        %462 = vmatprep.subr.mxu0 0.0
        %463 = vmatpush1.xpose.msra.mxu0 0.0
        %464 = vmatprep.subr.mxu0 0.0
        %465 = vmatpush1.xpose.msra.mxu0 0.0
        %466 = vmatprep.subr.mxu0 0.0
        %467 = vmatpush1.xpose.msra.mxu0 0.0
        %468 = vmatprep.mubr.f32.mxu0 0.0
        %469 = vmatmul.mubr.f32.gmra.mrb[0].mxu0 %v345
        %v470 = vpop.f32.mrb[0].mxu0
        %v471 = vadd.f32 %v326, %v470
        %v472 = vpop.f32.mrb[0].mxu0
        %473 = vmatprep.mubr.f32.mxu0 0.0
        %474 = vmatmul.mubr.f32.gmra.mrb[0].mxu0 %v348
        %v475 = vpop.f32.mrb[0].mxu0
        %v476 = vadd.f32 %v331, %v475
        %v477 = vpop.f32.mrb[0].mxu0
        %478 = vmatprep.mubr.f32.mxu0 0.0
        %479 = vmatmul.mubr.f32.gmra.mrb[0].mxu0 %v351
        %v480 = vpop.f32.mrb[0].mxu0
        %v481 = vadd.f32 %v336, %v480
        %v482 = vpop.f32.mrb[0].mxu0
        %483 = vmatprep.mubr.f32.mxu0 0.0
        %484 = vmatmul.mubr.f32.gmra.mrb[0].mxu0 %v354
        %v485 = vpop.f32.mrb[0].mxu0
        %v486 = vadd.f32 %v341, %v485
        %v487 = vpop.f32.mrb[0].mxu0
        %488 = vdwg.mxu0
        %v489 = vmul.f32 %v471, 0.01
        %v490 = vmul.f32 %v476, 0.01
        %v491 = vmul.f32 %v481, 0.01
        %v492 = vmul.f32 %v486, 0.01
        %v493 = vmax.f32 %v471, %v489
        %v494 = vmax.f32 %v476, %v490
        %v495 = vmax.f32 %v481, %v491
        %v496 = vmax.f32 %v486, %v492
        %v497 = vld [vmem:[%s3] sm:$0xff]
        %v498 = vld [vmem:[%s3 + $0x8] sm:$0xff]
        %v499 = vld [vmem:[%s3 + $0x10] sm:$0xff]
        %v500 = vld [vmem:[%s3 + $0x18] sm:$0xff]
        %v501 = vld [vmem:[%s4] sm:$0xff]
        %v502 = vld [vmem:[%s4 + $0x8] sm:$0xff]
        %v503 = vld [vmem:[%s4 + $0x10] sm:$0xff]
        %v504 = vld [vmem:[%s4 + $0x18] sm:$0xff]
        %506 = vset.pattern.permute.xlu0 0
        %507 = vperm.xlu0 %506, %v501
        %v508 = vpop.permute.xlu0 %507
        %511 = vset.pattern.permute.xlu0 0
        %512 = vperm.xlu0 %511, %v502
        %v513 = vpop.permute.xlu0 %512
        %516 = vset.pattern.permute.xlu0 0
        %517 = vperm.xlu0 %516, %v503
        %v518 = vpop.permute.xlu0 %517
        %521 = vset.pattern.permute.xlu0 0
        %522 = vperm.xlu0 %521, %v504
        %v523 = vpop.permute.xlu0 %522
        %vm525 = vcmask 261120
        %v527 = vsel %vm525, %v497, 0
        %v530 = vsel %vm525, %v498, 0
        %v533 = vsel %vm525, %v499, 0
        %v536 = vsel %vm525, %v500, 0
        %538 = vmatprep.subr.mxu0 0.0
        %539 = vmatpush1.msra.mxu0 %v493
        %540 = vmatprep.subr.mxu0 0.0
        %541 = vmatpush1.msra.mxu0 %v494
        %542 = vmatprep.subr.mxu0 0.0
        %543 = vmatpush1.msra.mxu0 %v495
        %544 = vmatprep.subr.mxu0 0.0
        %545 = vmatpush1.msra.mxu0 %v496
        %546 = vmatprep.subr.mxu0 0.0
        %547 = vmatpush1.msra.mxu0 0.0
        %548 = vmatprep.subr.mxu0 0.0
        %549 = vmatpush1.msra.mxu0 0.0
        %550 = vmatprep.subr.mxu0 0.0
        %551 = vmatpush1.msra.mxu0 0.0
        %552 = vmatprep.subr.mxu0 0.0
        %553 = vmatpush1.msra.mxu0 0.0
        %554 = vmatprep.subr.mxu0 0.0
        %555 = vmatpush1.msra.mxu0 0.0
        %556 = vmatprep.subr.mxu0 0.0
        %557 = vmatpush1.msra.mxu0 0.0
        %558 = vmatprep.subr.mxu0 0.0
        %559 = vmatpush1.msra.mxu0 0.0
        %560 = vmatprep.subr.mxu0 0.0
        %561 = vmatpush1.msra.mxu0 0.0
        %562 = vmatprep.subr.mxu0 0.0
        %563 = vmatpush1.msra.mxu0 0.0
        %564 = vmatprep.subr.mxu0 0.0
        %565 = vmatpush1.msra.mxu0 0.0
        %566 = vmatprep.subr.mxu0 0.0
        %567 = vmatpush1.msra.mxu0 0.0
        %568 = vmatprep.subr.mxu0 0.0
        %569 = vmatpush1.msra.mxu0 0.0
        %570 = vmatprep.subr.mxu0 0.0
        %571 = vmatpush1.msra.mxu0 0.0
        %572 = vmatprep.subr.mxu0 0.0
        %573 = vmatpush1.msra.mxu0 0.0
        %574 = vmatprep.subr.mxu0 0.0
        %575 = vmatpush1.msra.mxu0 0.0
        %576 = vmatprep.subr.mxu0 0.0
        %577 = vmatpush1.msra.mxu0 0.0
        %578 = vmatprep.subr.mxu0 0.0
        %579 = vmatpush1.msra.mxu0 0.0
        %580 = vmatprep.subr.mxu0 0.0
        %581 = vmatpush1.msra.mxu0 0.0
        %582 = vmatprep.subr.mxu0 0.0
        %583 = vmatpush1.msra.mxu0 0.0
        %584 = vmatprep.subr.mxu0 0.0
        %585 = vmatpush1.msra.mxu0 0.0
        %586 = vmatprep.subr.mxu0 0.0
        %587 = vmatpush1.msra.mxu0 0.0
        %588 = vmatprep.subr.mxu0 0.0
        %589 = vmatpush1.msra.mxu0 0.0
        %590 = vmatprep.subr.mxu0 0.0
        %591 = vmatpush1.msra.mxu0 0.0
        %592 = vmatprep.subr.mxu0 0.0
        %593 = vmatpush1.msra.mxu0 0.0
        %594 = vmatprep.subr.mxu0 0.0
        %595 = vmatpush1.msra.mxu0 0.0
        %596 = vmatprep.subr.mxu0 0.0
        %597 = vmatpush1.msra.mxu0 0.0
        %598 = vmatprep.subr.mxu0 0.0
        %599 = vmatpush1.msra.mxu0 0.0
        %600 = vmatprep.subr.mxu0 0.0
        %601 = vmatpush1.msra.mxu0 0.0
        %602 = vmatprep.mubr.f32.mxu0 0.0
        %603 = vmatmul.mubr.f32.gmra.mrb[0].mxu0 %v527
        %v604 = vpop.f32.mrb[0].mxu0
        %v605 = vadd.f32 %v508, %v604
        %v606 = vpop.f32.mrb[0].mxu0
        %607 = vmatprep.mubr.f32.mxu0 0.0
        %608 = vmatmul.mubr.f32.gmra.mrb[0].mxu0 %v530
        %v609 = vpop.f32.mrb[0].mxu0
        %v610 = vadd.f32 %v513, %v609
        %v611 = vpop.f32.mrb[0].mxu0
        %612 = vmatprep.mubr.f32.mxu0 0.0
        %613 = vmatmul.mubr.f32.gmra.mrb[0].mxu0 %v533
        %v614 = vpop.f32.mrb[0].mxu0
        %v615 = vadd.f32 %v518, %v614
        %v616 = vpop.f32.mrb[0].mxu0
        %617 = vmatprep.mubr.f32.mxu0 0.0
        %618 = vmatmul.mubr.f32.gmra.mrb[0].mxu0 %v536
        %v619 = vpop.f32.mrb[0].mxu0
        %v620 = vadd.f32 %v523, %v619
        %v621 = vpop.f32.mrb[0].mxu0
        %622 = vdwg.mxu0
        %v623 = vmul.f32 %v605, 0.01
        %v624 = vmul.f32 %v610, 0.01
        %v625 = vmul.f32 %v615, 0.01
        %v626 = vmul.f32 %v620, 0.01
        %v627 = vmax.f32 %v605, %v623
        %v628 = vmax.f32 %v610, %v624
        %v629 = vmax.f32 %v615, %v625
        %v630 = vmax.f32 %v620, %v626
        %v631 = vld [vmem:[%s5] sm:$0xff]
        %v632 = vld [vmem:[%s6] sm:$0xff]
        %634 = vset.pattern.permute.xlu0 0
        %635 = vperm.xlu0 %634, %v632
        %v636 = vpop.permute.xlu0 %635
        %v639 = vsel %vm525, %v631, 0
        %641 = vmatprep.subr.mxu0 0.0
        %642 = vmatpush1.msra.mxu0 %v627
        %643 = vmatprep.subr.mxu0 0.0
        %644 = vmatpush1.msra.mxu0 %v628
        %645 = vmatprep.subr.mxu0 0.0
        %646 = vmatpush1.msra.mxu0 %v629
        %647 = vmatprep.subr.mxu0 0.0
        %648 = vmatpush1.msra.mxu0 %v630
        %649 = vmatprep.subr.mxu0 0.0
        %650 = vmatpush1.msra.mxu0 0.0
        %651 = vmatprep.subr.mxu0 0.0
        %652 = vmatpush1.msra.mxu0 0.0
        %653 = vmatprep.subr.mxu0 0.0
        %654 = vmatpush1.msra.mxu0 0.0
        %655 = vmatprep.subr.mxu0 0.0
        %656 = vmatpush1.msra.mxu0 0.0
        %657 = vmatprep.subr.mxu0 0.0
        %658 = vmatpush1.msra.mxu0 0.0
        %659 = vmatprep.subr.mxu0 0.0
        %660 = vmatpush1.msra.mxu0 0.0
        %661 = vmatprep.subr.mxu0 0.0
        %662 = vmatpush1.msra.mxu0 0.0
        %663 = vmatprep.subr.mxu0 0.0
        %664 = vmatpush1.msra.mxu0 0.0
        %665 = vmatprep.subr.mxu0 0.0
        %666 = vmatpush1.msra.mxu0 0.0
        %667 = vmatprep.subr.mxu0 0.0
        %668 = vmatpush1.msra.mxu0 0.0
        %669 = vmatprep.subr.mxu0 0.0
        %670 = vmatpush1.msra.mxu0 0.0
        %671 = vmatprep.subr.mxu0 0.0
        %672 = vmatpush1.msra.mxu0 0.0
        %673 = vmatprep.subr.mxu0 0.0
        %674 = vmatpush1.msra.mxu0 0.0
        %675 = vmatprep.subr.mxu0 0.0
        %676 = vmatpush1.msra.mxu0 0.0
        %677 = vmatprep.subr.mxu0 0.0
        %678 = vmatpush1.msra.mxu0 0.0
        %679 = vmatprep.subr.mxu0 0.0
        %680 = vmatpush1.msra.mxu0 0.0
        %681 = vmatprep.subr.mxu0 0.0
        %682 = vmatpush1.msra.mxu0 0.0
        %683 = vmatprep.subr.mxu0 0.0
        %684 = vmatpush1.msra.mxu0 0.0
        %685 = vmatprep.subr.mxu0 0.0
        %686 = vmatpush1.msra.mxu0 0.0
        %687 = vmatprep.subr.mxu0 0.0
        %688 = vmatpush1.msra.mxu0 0.0
        %689 = vmatprep.subr.mxu0 0.0
        %690 = vmatpush1.msra.mxu0 0.0
        %691 = vmatprep.subr.mxu0 0.0
        %692 = vmatpush1.msra.mxu0 0.0
        %693 = vmatprep.subr.mxu0 0.0
        %694 = vmatpush1.msra.mxu0 0.0
        %695 = vmatprep.subr.mxu0 0.0
        %696 = vmatpush1.msra.mxu0 0.0
        %697 = vmatprep.subr.mxu0 0.0
        %698 = vmatpush1.msra.mxu0 0.0
        %699 = vmatprep.subr.mxu0 0.0
        %700 = vmatpush1.msra.mxu0 0.0
        %701 = vmatprep.subr.mxu0 0.0
        %702 = vmatpush1.msra.mxu0 0.0
        %703 = vmatprep.subr.mxu0 0.0
        %704 = vmatpush1.msra.mxu0 0.0
        %705 = vmatprep.mubr.f32.mxu0 0.0
        %706 = vmatmul.mubr.f32.gmra.mrb[0].mxu0 %v639
        %v707 = vpop.f32.mrb[0].mxu0
        %v708 = vadd.f32 %v636, %v707
        %v709 = vpop.f32.mrb[0].mxu0
        %710 = vdwg.mxu0
        %v711 = vrot.slane %v708, 4
        %v712 = vmax.f32 %v708, %v711
        %v713 = vrot.slane %v712, 2
        %v714 = vmax.f32 %v712, %v713
        %v715 = vrot.slane %v714, 1
        %v716 = vmax.f32 %v714, %v715
        %v717 = vsub.f32 %v708, %v716
        %v718 = vmul.f32 %v717, 1.442695
        %v719 = vpow.pop %v718
        %v720 = vrot.slane %v719, 4
        %v721 = vadd.f32 %v719, %v720
        %v722 = vrot.slane %v721, 2
        %v723 = vadd.f32 %v721, %v722
        %v724 = vrot.slane %v723, 1
        %v725 = vadd.f32 %v723, %v724
        %v726 = vrcp.pop %v725
        %v727 = vmul.f32 1.0, %v726
        %v728 = vmul.f32 %v719, %v727
        %729 = vst [vmem:[%s284] sm:$0xff] %v728
        %s730 = sand.u32 %s181, 1
        %s731 = scalar_lea.sflag [#allocation3], %s730
        %s732 = sand.u32 %s181, 1
        %s733 = smul.addr %s732, 8
        %s734 = scalar_lea.vmem [#allocation2], %s733
        // Predicated region
        $region49: #{tpu_custom_call.1} parent=47 // pred_check
          %p735 = pneg %p191
        $region50: #{tpu_custom_call.1} parent=47 // pred_check_branch
          %737 = sbr.rel (%p735) target = $region52
        $region51: #{tpu_custom_call.1} parent=47 // pred_region
          %s739 = ssub.s32 128, 128
          %740 = vsyncadd %s731, %s739
          %s741 = smul.addr %s21, 128
          %s742 = scalar_lea.hbm %s7, %s741
          %s744 = sshll.u32 %s734, 4
          %s745 = int_to_ptr.vmem [resolvable:$true] %s744
          %747 = dma.vmem_to_hbm [thread:$0]  %s745, 128, %s742, %s731
        $region52: #{tpu_custom_call.1} parent=47 // pred_fallthru
          _
      $region48: #{tpu_custom_call.1} parent=5 // pred_fallthru
        _
      %p748 = scmp.le.s32.totalorder 2, %s16
      // Predicated region
      $region53: #{tpu_custom_call.1} parent=5 // pred_check
        %p749 = pneg %p748
      $region54: #{tpu_custom_call.1} parent=5 // pred_check_branch
        %751 = sbr.rel (%p749) target = $region56
      $region55: #{tpu_custom_call.1} parent=5 // pred_region
        %s752 = ssub.s32 %s16, 2
        // Predicated region
        $region57: #{tpu_custom_call.1} parent=55 // pred_check
          %p753 = pneg %p197
        $region58: #{tpu_custom_call.1} parent=55 // pred_check_branch
          %755 = sbr.rel (%p753) target = $region60
        $region59: #{tpu_custom_call.1} parent=55 // pred_region
          %s756 = sand.u32 %s182, 1
          %s757 = scalar_lea.sflag [#allocation3], %s756
          %s758 = sand.u32 %s182, 1
          %s759 = smul.addr %s758, 8
          %s760 = scalar_lea.vmem [#allocation2], %s759
          %761 = dma.done %s757, 128
        $region60: #{tpu_custom_call.1} parent=55 // pred_fallthru
          _
      $region56: #{tpu_custom_call.1} parent=5 // pred_fallthru
        _
    $region6: #{tpu_custom_call.1} parent=1 // loop_footer
      %s20 = sadd.s32 1, %s16
    $region7: #{tpu_custom_call.1} parent=1 // loop_footer_branch
      %15 = sbr.rel target = $region3
    $region8: #{tpu_custom_call.1} parent=1 // loop_exit
      _
    %762 = vsyncpa [#allocation3], 1
    %s763 = scalar_lea.sflag [#allocation3], 1
    %764 = vsyncpa %s763, 1

</llo_original>
